<compile_context>
chip_gen: v7x
topology: tpu7x:2x2x1
jax: 0.10.0
libtpu: 0.0.40
codegen_flags: <defaults>
</compile_context>

<pallas_src>
import jax
import jax.numpy as jnp
from jax import lax
from jax.experimental import pallas as pl
from jax.experimental.pallas import tpu as pltpu

VOCAB = 10000    # nn.Embedding(10000, 100, padding_idx=9999)
EMB = 100        # embedding dim == conv in/out channels
SEQ = 100        # sequence length (must equal linear1 in_features == 100)
KSZ = 3          # conv kernel size
HID = 100        # linear1 features
OUT = 2          # linear2 features
OUT_PAD = 128    # lane-dense padded output width (sliced back to OUT outside)
KDIM = SEQ * KSZ # 300: contraction dim of the single fused matmul
TB_MAX = 256     # streamed bytes per tile: 256*300*4 B = 300 KB (double-buffered
                 # ~0.6 MiB) + 150 KB resident weights -> trivially fits scoped
                 # VMEM on v5e/v6e/v7x; bigger tiles amortize ~0.35 us/step.


def cnn_kernel(v_ref, wcomb_ref, b_ref, out_ref):
    """One batch tile = one lane-dense MXU matmul.

    v_ref     : (TB, KDIM)      f32  gathered conv-tap projections
    wcomb_ref : (KDIM, OUT_PAD) f32  shift/pad-folded (conv-mean @ lin1 @ lin2)
    b_ref     : (1, OUT_PAD)    f32  fully folded bias
    out_ref   : (TB, OUT_PAD)   f32  lane-dense padded logits
    """
    out_ref[...] = (
        jnp.dot(v_ref[...], wcomb_ref[...], preferred_element_type=jnp.float32)
        + b_ref[...]
    ).astype(out_ref.dtype)


def _pick_tile(b):
    """Batch tile: full-dim escape for tiny B, else multiple of 8 with >= 2
    grid tiles (so v7x megacore feeds both TensorCores), capped at TB_MAX."""
    if b <= 8:
        return b                                   # block == full array dim
    return min(TB_MAX, max(8, 8 * ((b + 15) // 16)))   # ~ceil(b/2) rounded to 8


@jax.jit
def cnn_forward(x, params):
    emb_table, w_conv, b_conv, w1, b1, w2, b2 = params
    B, L = x.shape
    if L != SEQ:
        raise ValueError(f"sequence length must be {SEQ} (linear1 in_features), got {L}")

    # ---- batch tiling -----------------------------------------------------
    TB = _pick_tile(B)
    pad_b = (-B) % TB
    if pad_b:
        x = jnp.pad(x, ((0, pad_b), (0, 0)), constant_values=VOCAB - 1)
    Bp = B + pad_b

    # ---- exact algebraic folds (the model is linear after the gather) ------
    wmean = jnp.mean(w_conv, axis=0)                      # (EMB, KSZ): mean over out-ch
    bmean = jnp.mean(b_conv)                              # scalar
    wf = w1.T @ w2.T                                      # (SEQ, OUT) folded linears
    bf = b1 @ w2.T + b2                                   # (OUT,)

    # Headline fix: pre-project the table so the gather moves 3 floats/token.
    # padding_idx row of emb_table is zero, so table_proj row 9999 stays zero.
    table_proj = emb_table @ wmean                        # (VOCAB, KSZ) ~120 KB
    # Gather is tiny now (~1.2 KB/sample); kept in XLA for robustness.
    # TODO(synk): fuse this gather via scalar-prefetched token ids + a
    # VMEM-resident table_proj to also drop the (Bp, 300) HBM slab.
    v = jnp.take(table_proj, x, axis=0).reshape(Bp, KDIM)  # (Bp, SEQ*KSZ) f32

    # Fold conv's +/-1 tap shifts + zero padding into the linear weights:
    #   y[b,:] = sum_{j,k} v[b, j*K+k] * wf_ext[j - k + 2, :] + b_total
    wf_pad = jnp.zeros((SEQ, OUT_PAD), jnp.float32).at[:, :OUT].set(wf)
    wf_ext = jnp.pad(wf_pad, ((1, 1), (0, 0)))            # zero rows at both ends
    shift_idx = jnp.arange(SEQ)[:, None] - jnp.arange(KSZ)[None, :] + 2   # (SEQ, KSZ)
    wcomb = wf_ext[shift_idx].reshape(KDIM, OUT_PAD)      # (300, 128) resident
    b_total = jnp.zeros((1, OUT_PAD), jnp.float32).at[0, :OUT].set(
        bf + bmean * wf.sum(axis=0))

    # TODO(synk): on v6e/v7x, streaming v (and the output) in bf16 halves the
    # remaining HBM bytes; kept f32 so the 1e-3 correctness tolerance is exact.

    # ---- Pallas call: grid over batch tiles --------------------------------
    grid = (Bp // TB,)
    flops = 2 * Bp * KDIM * OUT_PAD
    bytes_accessed = 4 * (v.size + wcomb.size + b_total.size + Bp * OUT_PAD)

    out = pl.pallas_call(
        cnn_kernel,
        out_shape=jax.ShapeDtypeStruct((Bp, OUT_PAD), jnp.float32),
        grid_spec=pltpu.PrefetchScalarGridSpec(
            num_scalar_prefetch=0,
            grid=grid,
            in_specs=[
                pl.BlockSpec((TB, KDIM), lambda i: (i, 0)),        # streamed taps
                pl.BlockSpec((KDIM, OUT_PAD), lambda i: (0, 0)),   # resident weights
                pl.BlockSpec((1, OUT_PAD), lambda i: (0, 0)),      # resident bias
            ],
            out_specs=pl.BlockSpec((TB, OUT_PAD), lambda i: (i, 0)),
        ),
        compiler_params=pltpu.CompilerParams(
            dimension_semantics=("parallel",),       # megacore-shards batch on v7x
            vmem_limit_bytes=32 * 1024 * 1024,
        ),
        cost_estimate=pl.CostEstimate(
            flops=flops, transcendentals=0, bytes_accessed=bytes_accessed),
    )(v, wcomb, b_total)

    return out[:B, :OUT]


def init_params(key):
    """Deterministic synthetic init mirroring the PyTorch module's shapes."""
    ks = jax.random.split(key, 7)
    emb_table = jax.random.normal(ks[0], (VOCAB, EMB), jnp.float32)
    emb_table = emb_table.at[VOCAB - 1].set(0.0)          # padding_idx=9999 -> zeros
    bc = 1.0 / (EMB * KSZ) ** 0.5
    w_conv = jax.random.uniform(ks[1], (EMB, EMB, KSZ), jnp.float32, -bc, bc)
    b_conv = jax.random.uniform(ks[2], (EMB,), jnp.float32, -bc, bc)
    bl = 1.0 / HID ** 0.5
    w1 = jax.random.uniform(ks[3], (HID, HID), jnp.float32, -bl, bl)
    b1 = jax.random.uniform(ks[4], (HID,), jnp.float32, -bl, bl)
    w2 = jax.random.uniform(ks[5], (OUT, HID), jnp.float32, -bl, bl)
    b2 = jax.random.uniform(ks[6], (OUT,), jnp.float32, -bl, bl)
    return (emb_table, w_conv, b_conv, w1, b1, w2, b2)


def reference(x, params):
    """Pure-JAX reference matching the PyTorch forward (NCL conv, unfused)."""
    emb_table, w_conv, b_conv, w1, b1, w2, b2 = params
    e = jnp.take(emb_table, x, axis=0)                    # (B, L, C)
    e_ncl = jnp.transpose(e, (0, 2, 1))                   # (B, C, L)
    y = lax.conv_general_dilated(e_ncl, w_conv, window_strides=(1,),
                                 padding=((1, 1),),
                                 dimension_numbers=('NCH', 'OIH', 'NCH'))
    y = y + b_conv[None, :, None]                         # (B, C, L)
    m = jnp.mean(y, axis=1)                               # (B, L)
    h = m @ w1.T + b1
    return h @ w2.T + b2


if __name__ == "__main__":
    key = jax.random.PRNGKey(0)
    pkey, xkey = jax.random.split(key)
    params = init_params(pkey)
    x = jax.random.randint(xkey, (2, SEQ), 0, VOCAB, dtype=jnp.int32)

    out = cnn_forward(x, params)
    out = jax.block_until_ready(out)

    ref = reference(x, params)
    assert out.shape == (2, OUT), out.shape
    assert jnp.allclose(out, ref, atol=1e-3, rtol=1e-3), (out, ref)
    print("KERNEL_OK")
</pallas_src>

<mosaic_0001>
module attributes {stable_mosaic.version = 11 : i64} {
  func.func @cnn_kernel(%arg0: i32, %arg1: memref<2x300xf32, #tpu.memory_space<vmem>>, %arg2: memref<300x128xf32, #tpu.memory_space<vmem>>, %arg3: memref<1x128xf32, #tpu.memory_space<vmem>>, %arg4: memref<2x128xf32, #tpu.memory_space<vmem>>) attributes {dimension_semantics = [#tpu.dimension_semantics<parallel>], iteration_bounds = array<i64: 1>, scalar_prefetch = 0 : i64, scratch_operands = 0 : i64, tpu.core_type = #tpu.core_type<tc>, window_params = [{transform_indices = @transform_0, window_bounds = array<i64: 2, 300>}, {pipeline_mode = #tpu.pipeline_mode<synchronous>, transform_indices = @transform_1, window_bounds = array<i64: 300, 128>}, {pipeline_mode = #tpu.pipeline_mode<synchronous>, transform_indices = @transform_2, window_bounds = array<i64: 1, 128>}, {transform_indices = @transform_3, window_bounds = array<i64: 2, 128>}]} {
    %c0 = arith.constant 0 : index
    %c0_0 = arith.constant 0 : index
    %0 = vector.load %arg1[%c0, %c0_0] : memref<2x300xf32, #tpu.memory_space<vmem>>, vector<2x300xf32>
    %c0_1 = arith.constant 0 : index
    %c0_2 = arith.constant 0 : index
    %1 = vector.load %arg2[%c0_1, %c0_2] : memref<300x128xf32, #tpu.memory_space<vmem>>, vector<300x128xf32>
    %cst = arith.constant dense<0.000000e+00> : vector<2x128xf32>
    %2 = tpu.matmul %0, %1, %cst {dimension_numbers = #tpu.dot_dimension_numbers<[1], [0], [0], [1], [0, 0, 1, 1], [], []>} : vector<2x300xf32>, vector<300x128xf32>, vector<2x128xf32> -> vector<2x128xf32>
    %c0_3 = arith.constant 0 : index
    %c0_4 = arith.constant 0 : index
    %3 = vector.load %arg3[%c0_3, %c0_4] : memref<1x128xf32, #tpu.memory_space<vmem>>, vector<1x128xf32>
    %4 = vector.broadcast %3 : vector<1x128xf32> to vector<2x128xf32>
    %5 = arith.addf %2, %4 : vector<2x128xf32>
    %c0_5 = arith.constant 0 : index
    %c0_6 = arith.constant 0 : index
    %6 = vector.load %arg4[%c0_5, %c0_6] : memref<2x128xf32, #tpu.memory_space<vmem>>, vector<2x128xf32>
    tpu.vector_store %arg4[%c0_5, %c0_6], %5 {strides = array<i32>} : memref<2x128xf32, #tpu.memory_space<vmem>>, vector<2x128xf32>,
    return
  }
  func.func @transform_0(%arg0: i32) -> (i32, i32) {
    %c0_i32 = arith.constant 0 : i32
    %c0_i32_0 = arith.constant 0 : i32
    return %arg0, %c0_i32 : i32, i32
  }
  func.func @transform_1(%arg0: i32) -> (i32, i32) {
    %c0_i32 = arith.constant 0 : i32
    %c0_i32_0 = arith.constant 0 : i32
    %c0_i32_1 = arith.constant 0 : i32
    return %c0_i32, %c0_i32_0 : i32, i32
  }
  func.func @transform_2(%arg0: i32) -> (i32, i32) {
    %c0_i32 = arith.constant 0 : i32
    %c0_i32_0 = arith.constant 0 : i32
    %c0_i32_1 = arith.constant 0 : i32
    return %c0_i32, %c0_i32_0 : i32, i32
  }
  func.func @transform_3(%arg0: i32) -> (i32, i32) {
    %c0_i32 = arith.constant 0 : i32
    %c0_i32_0 = arith.constant 0 : i32
    return %arg0, %c0_i32 : i32, i32
  }
}

</mosaic_0001>

<llo_original>
// kernel: cnn_forward.1
$region0: #{cnn_forward.1}
  #allocation0 [shape = 'u32[]', space=smem, size = 0x4, offset = 0x4, fixed_abs, tag = 'smem constant byte address 0x4 - core index']
  #allocation1 [shape = 'u32[144,128]{1,0:T(1,128)}', space=vmem, size = 0x12000, scoped, tag = 'internal scratch']
  %s0 = inlined_call_operand.vmem [shape: f32[2,300], index: 0, kind: input, shape index: {}]
  %s1 = inlined_call_operand.vmem [shape: f32[300,128], index: 1, kind: input, shape index: {}]
  %s2 = inlined_call_operand.vmem [shape: f32[1,128], index: 2, kind: input, shape index: {}]
  %s3 = inlined_call_operand.hbm [shape: f32[2,128], index: 3, kind: output, shape index: {}]
  %s4 = sld [smem:[#allocation0]]
  $region22: #{cnn_forward.1} parent=0
    _
  %s6 = ssub.s32 1, %s4
  %s7 = scalar_select 0, %s6, %s4
  $region1: #{cnn_forward.1} parent=0
    #allocation2 [shape = 'u8[1024]{0}', space=vmem, size = 0x400, scoped, tag = 'output window, operand 0, single buffered']
    #allocation3 [shape = 's32[1]{0}', space=sflag, size = 0x4, scoped, tag = 'scoped memory for cnn_forward.1']
    %8 = vsyncpa [#allocation3], 0
    // Predicated region
    $region2: #{cnn_forward.1} parent=1 // pred_check
      _
    $region3: #{cnn_forward.1} parent=1 // pred_check_branch
      %10 = sbr.rel (0) target = $region5
    $region4: #{cnn_forward.1} parent=1 // pred_region
      _
    $region5: #{cnn_forward.1} parent=1 // pred_fallthru
      _
    // Predicated region
    $region6: #{cnn_forward.1} parent=1 // pred_check
      _
    $region7: #{cnn_forward.1} parent=1 // pred_check_branch
      %12 = sbr.rel (0) target = $region9
    $region8: #{cnn_forward.1} parent=1 // pred_region
      _
    $region9: #{cnn_forward.1} parent=1 // pred_fallthru
      _
    // Predicated region
    $region10: #{cnn_forward.1} parent=1 // pred_check
      _
    $region11: #{cnn_forward.1} parent=1 // pred_check_branch
      %14 = sbr.rel (0) target = $region13
    $region12: #{cnn_forward.1} parent=1 // pred_region
      _
    $region13: #{cnn_forward.1} parent=1 // pred_fallthru
      _
    %v15 = vld [vmem:[%s0] sm:$0x3f]
    %v16 = vld [vmem:[%s1] sm:$0xff]
    %v17 = vld [vmem:[%s1 + $0x8] sm:$0xff]
    %v18 = vld [vmem:[%s1 + $0x10] sm:$0xff]
    %v19 = vld [vmem:[%s1 + $0x18] sm:$0xff]
    %v20 = vld [vmem:[%s1 + $0x20] sm:$0xff]
    %v21 = vld [vmem:[%s1 + $0x28] sm:$0xff]
    %v22 = vld [vmem:[%s1 + $0x30] sm:$0xff]
    %v23 = vld [vmem:[%s1 + $0x38] sm:$0xff]
    %v24 = vld [vmem:[%s1 + $0x40] sm:$0xff]
    %v25 = vld [vmem:[%s1 + $0x48] sm:$0xff]
    %v26 = vld [vmem:[%s1 + $0x50] sm:$0xff]
    %v27 = vld [vmem:[%s1 + $0x58] sm:$0xff]
    %v28 = vld [vmem:[%s1 + $0x60] sm:$0xff]
    %v29 = vld [vmem:[%s1 + $0x68] sm:$0xff]
    %v30 = vld [vmem:[%s1 + $0x70] sm:$0xff]
    %v31 = vld [vmem:[%s1 + $0x78] sm:$0xff]
    %v32 = vld [vmem:[%s1 + $0x80] sm:$0xff]
    %v33 = vld [vmem:[%s1 + $0x88] sm:$0xff]
    %v34 = vld [vmem:[%s1 + $0x90] sm:$0xff]
    %v35 = vld [vmem:[%s1 + $0x98] sm:$0xff]
    %v36 = vld [vmem:[%s1 + $0xa0] sm:$0xff]
    %v37 = vld [vmem:[%s1 + $0xa8] sm:$0xff]
    %v38 = vld [vmem:[%s1 + $0xb0] sm:$0xff]
    %v39 = vld [vmem:[%s1 + $0xb8] sm:$0xff]
    %v40 = vld [vmem:[%s1 + $0xc0] sm:$0xff]
    %v41 = vld [vmem:[%s1 + $0xc8] sm:$0xff]
    %v42 = vld [vmem:[%s1 + $0xd0] sm:$0xff]
    %v43 = vld [vmem:[%s1 + $0xd8] sm:$0xff]
    %v44 = vld [vmem:[%s1 + $0xe0] sm:$0xff]
    %v45 = vld [vmem:[%s1 + $0xe8] sm:$0xff]
    %v46 = vld [vmem:[%s1 + $0xf0] sm:$0xff]
    %v47 = vld [vmem:[%s1 + $0xf8] sm:$0xff]
    %v48 = vld [vmem:[%s1 + $0x100] sm:$0xff]
    %v49 = vld [vmem:[%s1 + $0x108] sm:$0xff]
    %v50 = vld [vmem:[%s1 + $0x110] sm:$0xff]
    %v51 = vld [vmem:[%s1 + $0x118] sm:$0xff]
    %v52 = vld [vmem:[%s1 + $0x120] sm:$0xff]
    %v53 = vld [vmem:[%s1 + $0x128] sm:$0xf]
    %v54 = vld [vmem:[%s2] sm:$0x1]
    %v56 = vlaneseq
    %v57 = vshrl.u32 %v56, 7
    %v58 = vsub.s32 0, %v57
    %v59 = vrot.slane %v54, %v58
    %v62 = vcombine.high %v15, %v15
    %v64 = vunpack.c.l.s4 1983009808
    %v65 = vunpack.c.0.s8 %v64
    %v66 = vlaneseq
    %v67 = vshrl.u32 %v66, 7
    %v68 = vsub.s32 %v65, %v67
    %v69 = vrot.slane %v15, %v68
    %v71 = vunpack.c.l.s4 1983009808
    %v72 = vunpack.c.0.s8 %v71
    %v73 = vlaneseq
    %v74 = vshrl.u32 %v73, 7
    %v75 = vsub.s32 %v72, %v74
    %v76 = vrot.slane %v62, %v75
    %v77 = vcombine.high %v69, %v69
    %vm80 = vcmask 359424
    %v81 = vsel %vm80, %v76, 0
    %vm83 = vcmask 1043456
    %v85 = vsel %vm83, %v53, 0
    %87 = vmatprep.subr.mxu0 0.0
    %88 = vmatpush1.msra.mxu0 %v16
    %89 = vmatprep.subr.mxu0 0.0
    %90 = vmatpush1.msra.mxu0 %v17
    %91 = vmatprep.subr.mxu0 0.0
    %92 = vmatpush1.msra.mxu0 %v18
    %93 = vmatprep.subr.mxu0 0.0
    %94 = vmatpush1.msra.mxu0 %v19
    %95 = vmatprep.subr.mxu0 0.0
    %96 = vmatpush1.msra.mxu0 %v20
    %97 = vmatprep.subr.mxu0 0.0
    %98 = vmatpush1.msra.mxu0 %v21
    %99 = vmatprep.subr.mxu0 0.0
    %100 = vmatpush1.msra.mxu0 %v22
    %101 = vmatprep.subr.mxu0 0.0
    %102 = vmatpush1.msra.mxu0 %v23
    %103 = vmatprep.subr.mxu0 0.0
    %104 = vmatpush1.msra.mxu0 %v24
    %105 = vmatprep.subr.mxu0 0.0
    %106 = vmatpush1.msra.mxu0 %v25
    %107 = vmatprep.subr.mxu0 0.0
    %108 = vmatpush1.msra.mxu0 %v26
    %109 = vmatprep.subr.mxu0 0.0
    %110 = vmatpush1.msra.mxu0 %v27
    %111 = vmatprep.subr.mxu0 0.0
    %112 = vmatpush1.msra.mxu0 %v28
    %113 = vmatprep.subr.mxu0 0.0
    %114 = vmatpush1.msra.mxu0 %v29
    %115 = vmatprep.subr.mxu0 0.0
    %116 = vmatpush1.msra.mxu0 %v30
    %117 = vmatprep.subr.mxu0 0.0
    %118 = vmatpush1.msra.mxu0 %v31
    %119 = vmatprep.subr.mxu0 0.0
    %120 = vmatpush1.msra.mxu0 %v32
    %121 = vmatprep.subr.mxu0 0.0
    %122 = vmatpush1.msra.mxu0 %v33
    %123 = vmatprep.subr.mxu0 0.0
    %124 = vmatpush1.msra.mxu0 %v34
    %125 = vmatprep.subr.mxu0 0.0
    %126 = vmatpush1.msra.mxu0 %v35
    %127 = vmatprep.subr.mxu0 0.0
    %128 = vmatpush1.msra.mxu0 %v36
    %129 = vmatprep.subr.mxu0 0.0
    %130 = vmatpush1.msra.mxu0 %v37
    %131 = vmatprep.subr.mxu0 0.0
    %132 = vmatpush1.msra.mxu0 %v38
    %133 = vmatprep.subr.mxu0 0.0
    %134 = vmatpush1.msra.mxu0 %v39
    %135 = vmatprep.subr.mxu0 0.0
    %136 = vmatpush1.msra.mxu0 %v40
    %137 = vmatprep.subr.mxu0 0.0
    %138 = vmatpush1.msra.mxu0 %v41
    %139 = vmatprep.subr.mxu0 0.0
    %140 = vmatpush1.msra.mxu0 %v42
    %141 = vmatprep.subr.mxu0 0.0
    %142 = vmatpush1.msra.mxu0 %v43
    %143 = vmatprep.subr.mxu0 0.0
    %144 = vmatpush1.msra.mxu0 %v44
    %145 = vmatprep.subr.mxu0 0.0
    %146 = vmatpush1.msra.mxu0 %v45
    %147 = vmatprep.subr.mxu0 0.0
    %148 = vmatpush1.msra.mxu0 %v46
    %149 = vmatprep.subr.mxu0 0.0
    %150 = vmatpush1.msra.mxu0 %v47
    %151 = vmatprep.mubr.f32.mxu0 %v77
    %152 = vmatmul.mubr.f32.gmra.mrb[0].mxu0 %v69
    %v153 = vpop.f32.mrb[0].mxu0
    %v154 = vadd.f32 %v59, %v153
    %v155 = vpop.f32.mrb[0].mxu0
    %156 = vdwg.mxu0
    %157 = vmatprep.subr.mxu0 0.0
    %158 = vmatpush1.msra.mxu0 %v48
    %159 = vmatprep.subr.mxu0 0.0
    %160 = vmatpush1.msra.mxu0 %v49
    %161 = vmatprep.subr.mxu0 0.0
    %162 = vmatpush1.msra.mxu0 %v50
    %163 = vmatprep.subr.mxu0 0.0
    %164 = vmatpush1.msra.mxu0 %v51
    %165 = vmatprep.subr.mxu0 0.0
    %166 = vmatpush1.msra.mxu0 %v52
    %167 = vmatprep.subr.mxu0 0.0
    %168 = vmatpush1.msra.mxu0 %v85
    %169 = vmatprep.subr.mxu0 0.0
    %170 = vmatpush1.msra.mxu0 0.0
    %171 = vmatprep.subr.mxu0 0.0
    %172 = vmatpush1.msra.mxu0 0.0
    %173 = vmatprep.subr.mxu0 0.0
    %174 = vmatpush1.msra.mxu0 0.0
    %175 = vmatprep.subr.mxu0 0.0
    %176 = vmatpush1.msra.mxu0 0.0
    %177 = vmatprep.subr.mxu0 0.0
    %178 = vmatpush1.msra.mxu0 0.0
    %179 = vmatprep.subr.mxu0 0.0
    %180 = vmatpush1.msra.mxu0 0.0
    %181 = vmatprep.subr.mxu0 0.0
    %182 = vmatpush1.msra.mxu0 0.0
    %183 = vmatprep.subr.mxu0 0.0
    %184 = vmatpush1.msra.mxu0 0.0
    %185 = vmatprep.subr.mxu0 0.0
    %186 = vmatpush1.msra.mxu0 0.0
    %187 = vmatprep.subr.mxu0 0.0
    %188 = vmatpush1.msra.mxu0 0.0
    %189 = vmatprep.subr.mxu0 0.0
    %190 = vmatpush1.msra.mxu0 0.0
    %191 = vmatprep.subr.mxu0 0.0
    %192 = vmatpush1.msra.mxu0 0.0
    %193 = vmatprep.subr.mxu0 0.0
    %194 = vmatpush1.msra.mxu0 0.0
    %195 = vmatprep.subr.mxu0 0.0
    %196 = vmatpush1.msra.mxu0 0.0
    %197 = vmatprep.subr.mxu0 0.0
    %198 = vmatpush1.msra.mxu0 0.0
    %199 = vmatprep.subr.mxu0 0.0
    %200 = vmatpush1.msra.mxu0 0.0
    %201 = vmatprep.subr.mxu0 0.0
    %202 = vmatpush1.msra.mxu0 0.0
    %203 = vmatprep.subr.mxu0 0.0
    %204 = vmatpush1.msra.mxu0 0.0
    %205 = vmatprep.subr.mxu0 0.0
    %206 = vmatpush1.msra.mxu0 0.0
    %207 = vmatprep.subr.mxu0 0.0
    %208 = vmatpush1.msra.mxu0 0.0
    %209 = vmatprep.subr.mxu0 0.0
    %210 = vmatpush1.msra.mxu0 0.0
    %211 = vmatprep.subr.mxu0 0.0
    %212 = vmatpush1.msra.mxu0 0.0
    %213 = vmatprep.subr.mxu0 0.0
    %214 = vmatpush1.msra.mxu0 0.0
    %215 = vmatprep.subr.mxu0 0.0
    %216 = vmatpush1.msra.mxu0 0.0
    %217 = vmatprep.subr.mxu0 0.0
    %218 = vmatpush1.msra.mxu0 0.0
    %219 = vmatprep.subr.mxu0 0.0
    %220 = vmatpush1.msra.mxu0 0.0
    %221 = vmatprep.mubr.f32.mxu0 0.0
    %222 = vmatmul.mubr.f32.gmra.mrb[0].mxu0 %v81
    %v223 = vpop.f32.mrb[0].mxu0
    %v224 = vadd.f32 %v154, %v223
    %v225 = vpop.f32.mrb[0].mxu0
    %226 = vdwg.mxu0
    %227 = vst [vmem:[#allocation2] sm:$0x3] %v224
    // Predicated region
    $region14: #{cnn_forward.1} parent=1 // pred_check
      _
    $region15: #{cnn_forward.1} parent=1 // pred_check_branch
      %229 = sbr.rel (0) target = $region17
    $region16: #{cnn_forward.1} parent=1 // pred_region
      %s231 = ssub.s32 32, 32
      %232 = vsyncadd [#allocation3], %s231
      %s234 = sshll.u32 [#allocation2], 4
      %s235 = int_to_ptr.vmem [resolvable:$true] %s234
      %237 = dma.vmem_to_hbm [thread:$0]  %s235, 32, %s3, [#allocation3]
    $region17: #{cnn_forward.1} parent=1 // pred_fallthru
      _
    // Predicated region
    $region18: #{cnn_forward.1} parent=1 // pred_check
      _
    $region19: #{cnn_forward.1} parent=1 // pred_check_branch
      %239 = sbr.rel (0) target = $region21
    $region20: #{cnn_forward.1} parent=1 // pred_region
      %240 = dma.done [#allocation3], 32
    $region21: #{cnn_forward.1} parent=1 // pred_fallthru
      _
    %241 = vsyncpa [#allocation3], 1

</llo_original>
